<compile_context>
chip_gen: v7x
topology: tpu7x:2x2x1
jax: 0.10.0
libtpu: 0.0.40
codegen_flags: <defaults>
</compile_context>

<pallas_src>
import functools
import math

import jax
import jax.numpy as jnp
from jax import lax
from jax.experimental import pallas as pl
from jax.experimental.pallas import tpu as pltpu

HALF_MIN = -65504.0                    # torch.finfo(torch.half).min
VMEM_LIMIT_BYTES = 32 * 1024 * 1024    # safe on v5e/v6e/v7x scoped VMEM
KV_BUFFERS = 2                         # set 3 on v7x to hide small-KV DMA latency


# ----------------------------------------------------------------------------
# Tile-size helpers
# ----------------------------------------------------------------------------
def _pick_tile(dim, target, align):
    """Largest tile <= target that is a multiple of `align` and divides `dim`;
    falls back to the full dim (always a legal block size)."""
    if dim <= target:
        return dim
    t = (target // align) * align
    while t >= align:
        if dim % t == 0:
            return t
        t -= align
    return dim


def _pick_head_group(num_heads, head_dim, batch):
    """Heads folded per attention grid step so hf*head_dim ~ 128-256 lanes."""
    target = max(1, min(num_heads, 256 // max(head_dim, 1)))
    if batch == 1 and num_heads >= 2:
        # Keep >=2 head-groups so a "parallel" grid axis can span both v7x cores.
        target = min(target, max(1, num_heads // 2))
    for t in range(target, 0, -1):
        if num_heads % t == 0:
            return t
    return 1


# ----------------------------------------------------------------------------
# Kernel 1: generic tiled linear (x @ W^T + b) with f32 accumulator.
# Used both for the fused QKV projection (W = [Wq/sqrt(d); Wk; Wv]) and out_proj.
# ----------------------------------------------------------------------------
def _linear_kernel(x_ref, w_ref, b_ref, o_ref, acc_ref):
    @pl.when(pl.program_id(2) == 0)
    def _():
        acc_ref[...] = jnp.zeros_like(acc_ref)

    # Contract last dims: x @ W^T with W kept as (out, in) -> no transposes.
    acc_ref[...] += lax.dot_general(x_ref[...], w_ref[...], (((1,), (1,)), ((), ())),
                                    preferred_element_type=jnp.float32)

    @pl.when(pl.program_id(2) == pl.num_programs(2) - 1)
    def _():
        o_ref[...] = (acc_ref[...] + b_ref[...]).astype(o_ref.dtype)


def _linear(x2d, w, b):
    """x2d: (M, K) bf16; w: (N, K) bf16; b: (N,) f32 -> (M, N) in x2d.dtype."""
    m, kdim = x2d.shape
    n = w.shape[0]
    tm = _pick_tile(m, 512, 16)        # 16-row alignment: bf16 packs 2 rows/sublane
    tn = _pick_tile(n, 256, 128)
    tk = _pick_tile(kdim, 1024, 128)
    grid = (m // tm, n // tn, kdim // tk)
    itemsize = x2d.dtype.itemsize
    flops = 2 * m * n * kdim
    bytes_accessed = int((m * kdim * (n // tn) + n * kdim * (m // tm) + m * n)
                         * itemsize + n * 4)
    return pl.pallas_call(
        _linear_kernel,
        grid=grid,
        in_specs=[pl.BlockSpec((tm, tk), lambda i, j, k: (i, k)),
                  pl.BlockSpec((tn, tk), lambda i, j, k: (j, k)),   # W stays (out,in)
                  pl.BlockSpec((1, tn), lambda i, j, k: (0, j))],
        out_specs=pl.BlockSpec((tm, tn), lambda i, j, k: (i, j)),
        out_shape=jax.ShapeDtypeStruct((m, n), x2d.dtype),
        scratch_shapes=[pltpu.VMEM((tm, tn), jnp.float32)],
        compiler_params=pltpu.CompilerParams(
            dimension_semantics=("parallel", "parallel", "arbitrary"),
            vmem_limit_bytes=VMEM_LIMIT_BYTES),
        cost_estimate=pl.CostEstimate(flops=flops, transcendentals=0,
                                      bytes_accessed=bytes_accessed),
    )(x2d, w, b[None, :])


# ----------------------------------------------------------------------------
# Kernel 2: flash-style attention over a (batch, head-group, q-block, kv-block)
# grid with online softmax; in-kernel causal mask or additive bf16 bias.
# ----------------------------------------------------------------------------
def _flash_attention_kernel(*refs, causal, tq, tkv):
    if causal:
        q_ref, k_ref, v_ref, o_ref, m_sc, l_sc, acc_sc = refs
        bias_ref = None
    else:
        q_ref, k_ref, v_ref, bias_ref, o_ref, m_sc, l_sc, acc_sc = refs

    qi = pl.program_id(2)
    ki = pl.program_id(3)

    @pl.when(ki == 0)
    def _():
        m_sc[...] = jnp.full_like(m_sc, -jnp.inf)
        l_sc[...] = jnp.zeros_like(l_sc)
        acc_sc[...] = jnp.zeros_like(acc_sc)

    def update():
        q = q_ref[0, 0]                       # (hf, tq, D)  bf16, already / sqrt(D)
        k = k_ref[0, 0]                       # (hf, tkv, D)
        v = v_ref[0, 0]                       # (hf, tkv, D)
        # Scores: contract D directly (no k.T), batched over the folded head dim.
        s = lax.dot_general(q, k, (((2,), (2,)), ((0,), (0,))),
                            preferred_element_type=jnp.float32)    # (hf, tq, tkv)
        if causal:
            # In-kernel causal mask: zero HBM mask traffic.
            q_pos = qi * tq + lax.broadcasted_iota(jnp.int32, (tq, tkv), 0)
            k_pos = ki * tkv + lax.broadcasted_iota(jnp.int32, (tq, tkv), 1)
            s = jnp.where((q_pos >= k_pos)[None], s, jnp.float32(HALF_MIN))
        else:
            # Additive {0, HALF_MIN} bias.  NOTE: masked entries rely on
            # exp(~HALF_MIN - m) underflowing to exactly 0.0 in f32; a fully
            # masked *leading* block is likewise cancelled because alpha
            # underflows to 0 on the first unmasked block (matches the
            # torch.half masked_fill + softmax behaviour).
            s = s + bias_ref[0].astype(jnp.float32)

        m_prev = m_sc[...]
        m_new = jnp.maximum(m_prev, jnp.max(s, axis=-1, keepdims=True))
        alpha = jnp.exp(m_prev - m_new)
        p = jnp.exp(s - m_new)
        l_sc[...] = alpha * l_sc[...] + jnp.sum(p, axis=-1, keepdims=True)
        pv = lax.dot_general(p.astype(v.dtype), v, (((2,), (1,)), ((0,), (0,))),
                             preferred_element_type=jnp.float32)   # (hf, tq, D)
        acc_sc[...] = alpha * acc_sc[...] + pv
        m_sc[...] = m_new

    if causal:
        # Skip KV blocks entirely above the diagonal (~2x fewer MXU/EUP ops);
        # their DMA was already pinned to the last useful block by the index_map.
        pl.when(ki * tkv < (qi + 1) * tq)(update)
    else:
        update()

    @pl.when(ki == pl.num_programs(3) - 1)
    def _():
        hf, _, d = acc_sc.shape
        out = acc_sc[...] * pl.reciprocal(l_sc[...], approx=False)   # (hf, tq, D)
        # Lane-dense store: concatenate folded heads along the lane axis so the
        # written block's last dim is hf*D (unmasked vst when hf*D >= 128).
        out = jnp.concatenate([out[h] for h in range(hf)], axis=-1)  # (tq, hf*D)
        o_ref[0, 0] = out.astype(o_ref.dtype)


def _attention(qkv5, bias4, *, causal):
    """qkv5: (3, B, NH, S, D) bf16 (Q already scaled); bias4: additive bf16 bias
    of shape (1|B, 1|NH, S, S) or None when causal. Returns (B, NH//hf, S, hf*D)."""
    _, b, nh, s, d = qkv5.shape
    hf = _pick_head_group(nh, d, b)
    g = nh // hf
    tq = _pick_tile(s, 256, 16)
    tkv = _pick_tile(s, 512, 128)
    grid = (b, g, s // tq, s // tkv)

    if causal:
        def kv_block(qi, ki):
            # Pin the DMA for fully-masked KV blocks to the last useful block:
            # the block index stops changing, so no new HBM bytes are fetched.
            return jnp.minimum(ki, ((qi + 1) * tq - 1) // tkv)
    else:
        def kv_block(qi, ki):
            return ki

    kv_kwargs = {} if KV_BUFFERS == 2 else {"pipeline_mode": pl.Buffered(KV_BUFFERS)}
    q_spec = pl.BlockSpec((1, 1, hf, tq, d), lambda bi, gi, qi, ki: (0, bi, gi, qi, 0))
    k_spec = pl.BlockSpec((1, 1, hf, tkv, d),
                          lambda bi, gi, qi, ki: (1, bi, gi, kv_block(qi, ki), 0),
                          **kv_kwargs)
    v_spec = pl.BlockSpec((1, 1, hf, tkv, d),
                          lambda bi, gi, qi, ki: (2, bi, gi, kv_block(qi, ki), 0),
                          **kv_kwargs)
    o_spec = pl.BlockSpec((1, 1, tq, hf * d), lambda bi, gi, qi, ki: (bi, gi, qi, 0))

    in_specs = [q_spec, k_spec, v_spec]
    inputs = [qkv5, qkv5, qkv5]          # same stacked array, three windows
    if not causal:
        bm, hm_full = bias4.shape[0], bias4.shape[1]
        hm = hf if hm_full > 1 else 1
        in_specs.append(pl.BlockSpec(
            (1, hm, tq, tkv),
            lambda bi, gi, qi, ki: (bi if bm > 1 else 0,
                                    gi if hm_full > 1 else 0, qi, ki)))
        inputs.append(bias4)

    itemsize = qkv5.dtype.itemsize
    flops = 4 * b * nh * s * s * d
    transc = b * nh * s * s
    kv_bytes = 2 * b * nh * s * d * itemsize * (s // tq)
    if causal:
        flops //= 2
        transc //= 2
        kv_bytes //= 2
    bytes_accessed = int(kv_bytes + 2 * b * nh * s * d * itemsize)
    if not causal:
        bytes_accessed += int(bias4.size * bias4.dtype.itemsize
                              * (b // bias4.shape[0]) * (nh // bias4.shape[1]) // hf)

    return pl.pallas_call(
        functools.partial(_flash_attention_kernel, causal=causal, tq=tq, tkv=tkv),
        grid=grid,
        in_specs=in_specs,
        out_specs=o_spec,
        out_shape=jax.ShapeDtypeStruct((b, g, s, hf * d), qkv5.dtype),
        scratch_shapes=[pltpu.VMEM((hf, tq, 1), jnp.float32),
                        pltpu.VMEM((hf, tq, 1), jnp.float32),
                        pltpu.VMEM((hf, tq, d), jnp.float32)],
        compiler_params=pltpu.CompilerParams(
            dimension_semantics=("parallel", "parallel", "parallel", "arbitrary"),
            vmem_limit_bytes=VMEM_LIMIT_BYTES),
        cost_estimate=pl.CostEstimate(flops=flops, transcendentals=transc,
                                      bytes_accessed=bytes_accessed),
    )(*inputs)


# ----------------------------------------------------------------------------
# Forward wrapper
# ----------------------------------------------------------------------------
def self_attention_forward(hidden_states, attention_mask, params, num_heads,
                           use_cache=False, is_causal=False,
                           compute_dtype=jnp.bfloat16):
    """hidden_states: (S, B, H).  attention_mask broadcastable to (B, NH, S, S)
    with nonzero/True = keep (ltor_mask convention of the PyTorch module), or
    None when is_causal=True (mask generated inside the kernel)."""
    s, b, h = hidden_states.shape
    d = h // num_heads
    inv_norm = 1.0 / math.sqrt(d)
    cd = compute_dtype

    # Fuse Q/K/V into one (3H, H) weight and fold the 1/sqrt(d) Q scale into it.
    w_qkv = jnp.concatenate([params["wq"] * inv_norm, params["wk"], params["wv"]],
                            axis=0).astype(cd)                          # (3H, H)
    b_qkv = jnp.concatenate([params["bq"] * inv_norm, params["bk"], params["bv"]]
                            ).astype(jnp.float32)                       # (3H,)

    x2d = hidden_states.astype(cd).reshape(s * b, h)
    qkv2d = _linear(x2d, w_qkv, b_qkv)                                  # (S*B, 3H)

    kv_cache = None
    if use_cache:
        kv_cache = jnp.stack((qkv2d[:, h:2 * h].reshape(s, b, num_heads, d),
                              qkv2d[:, 2 * h:].reshape(s, b, num_heads, d)))
    # TODO(synk): layer_past concatenation (decode-time KV append) not implemented.

    # Single host-side layout op for Q, K and V together:
    # (S*B, 3H) -> (S, B, 3, NH, D) -> (3, B, NH, S, D).
    qkv5 = qkv2d.reshape(s, b, 3, num_heads, d).transpose(2, 1, 3, 0, 4)

    if is_causal:
        bias4 = None
    else:
        if attention_mask.ndim == 2:
            mask4 = attention_mask[None, None]
        elif attention_mask.ndim == 4:
            mask4 = attention_mask
        else:
            raise ValueError("attention_mask must have rank 2 or 4")
        assert mask4.shape[0] in (1, b) and mask4.shape[1] in (1, num_heads)
        assert mask4.shape[2:] == (s, s)
        # Additive bf16 bias {0, HALF_MIN}: half the bytes of int32 and a single
        # VPU add in the kernel instead of int compare + select.
        bias4 = jnp.where(mask4 != 0, 0.0, HALF_MIN).astype(cd)

    ctx = _attention(qkv5, bias4, causal=is_causal)          # (B, G, S, hf*D)
    ctx2d = ctx.transpose(2, 0, 1, 3).reshape(s * b, h)      # head order preserved

    out2d = _linear(ctx2d, params["wo"].astype(cd), params["bo"].astype(jnp.float32))
    return out2d.reshape(s, b, h), kv_cache


# ----------------------------------------------------------------------------
# Pure-JAX reference (mirrors the bf16-compute / f32-accumulate path).
# ----------------------------------------------------------------------------
def _reference(hidden_states, attention_mask, params, num_heads,
               compute_dtype=jnp.bfloat16):
    s, b, h = hidden_states.shape
    d = h // num_heads
    inv_norm = 1.0 / math.sqrt(d)
    cd = compute_dtype
    x = hidden_states.astype(cd).reshape(s * b, h)

    def proj(wname, bname):
        return (jnp.dot(x, params[wname].astype(cd).T,
                        preferred_element_type=jnp.float32)
                + params[bname].astype(jnp.float32))

    q = (proj("wq", "bq") * inv_norm).astype(cd)
    k = proj("wk", "bk").astype(cd)
    v = proj("wv", "bv").astype(cd)
    to_bnh = lambda t: t.reshape(s, b, num_heads, d).transpose(1, 2, 0, 3)
    q, k, v = to_bnh(q), to_bnh(k), to_bnh(v)                 # (B, NH, S, D)
    scores = jnp.einsum("bhqd,bhkd->bhqk", q, k, preferred_element_type=jnp.float32)
    scores = jnp.where(attention_mask != 0, scores, HALF_MIN)
    probs = jax.nn.softmax(scores, axis=-1)
    ctx = jnp.einsum("bhqk,bhkd->bhqd", probs.astype(cd), v,
                     preferred_element_type=jnp.float32).astype(cd)
    ctx = ctx.transpose(2, 0, 1, 3).reshape(s * b, h)
    out = (jnp.dot(ctx, params["wo"].astype(cd).T, preferred_element_type=jnp.float32)
           + params["bo"].astype(jnp.float32))
    return out.reshape(s, b, h)


def _xavier_normal(key, shape):
    fan_out, fan_in = shape
    std = math.sqrt(2.0 / (fan_in + fan_out))
    return std * jax.random.normal(key, shape, dtype=jnp.float32)


if __name__ == "__main__":
    S, B, H, NH = 8, 2, 32, 4

    key = jax.random.PRNGKey(0)
    k_x, k_q, k_k, k_v, k_o = jax.random.split(key, 5)

    hidden_states = jax.random.normal(k_x, (S, B, H), dtype=jnp.float32)

    params = {
        "wq": _xavier_normal(k_q, (H, H)), "bq": jnp.zeros((H,), jnp.float32),
        "wk": _xavier_normal(k_k, (H, H)), "bk": jnp.zeros((H,), jnp.float32),
        "wv": _xavier_normal(k_v, (H, H)), "bv": jnp.zeros((H,), jnp.float32),
        "wo": _xavier_normal(k_o, (H, H)), "bo": jnp.zeros((H,), jnp.float32),
    }

    causal = jnp.tril(jnp.ones((S, S), dtype=jnp.int32))
    attention_mask = causal[None, None]            # broadcastable (1, 1, S, S)

    # Path 1: in-kernel causal mask (no HBM mask traffic, diagonal block skip).
    out_causal, _ = self_attention_forward(
        hidden_states, None, params, num_heads=NH, use_cache=False, is_causal=True)
    # Path 2: generic mask streamed as additive bf16 bias.
    out_masked, _ = self_attention_forward(
        hidden_states, attention_mask, params, num_heads=NH, use_cache=False,
        is_causal=False)
    jax.block_until_ready((out_causal, out_masked))

    ref = _reference(hidden_states, attention_mask, params, NH)
    # bf16 MXU compute -> loosened tolerance.
    assert jnp.allclose(out_causal.astype(jnp.float32), ref, atol=3e-2, rtol=3e-2), \
        "causal path mismatch vs reference"
    assert jnp.allclose(out_masked.astype(jnp.float32), ref, atol=3e-2, rtol=3e-2), \
        "masked path mismatch vs reference"

    print("KERNEL_OK")
</pallas_src>

<mosaic_0001>
module attributes {stable_mosaic.version = 11 : i64} {
  func.func @_linear_kernel(%arg0: i32, %arg1: i32, %arg2: i32, %arg3: memref<16x32xbf16, #tpu.memory_space<vmem>>, %arg4: memref<96x32xbf16, #tpu.memory_space<vmem>>, %arg5: memref<1x96xf32, #tpu.memory_space<vmem>>, %arg6: memref<16x96xbf16, #tpu.memory_space<vmem>>, %arg7: memref<16x96xf32, #tpu.memory_space<vmem>>) attributes {dimension_semantics = [#tpu.dimension_semantics<parallel>, #tpu.dimension_semantics<parallel>, #tpu.dimension_semantics<arbitrary>], iteration_bounds = array<i64: 1, 1, 1>, scalar_prefetch = 0 : i64, scratch_operands = 1 : i64, tpu.core_type = #tpu.core_type<tc>, window_params = [{transform_indices = @transform_0, window_bounds = array<i64: 16, 32>}, {transform_indices = @transform_1, window_bounds = array<i64: 96, 32>}, {transform_indices = @transform_2, window_bounds = array<i64: 1, 96>}, {transform_indices = @transform_3, window_bounds = array<i64: 16, 96>}]} {
    %c0_i32 = arith.constant 0 : i32
    %0 = arith.cmpi eq, %arg2, %c0_i32 : i32
    %1 = arith.extui %0 : i1 to i32
    %c0_i32_0 = arith.constant 0 : i32
    %2 = arith.cmpi ne, %1, %c0_i32_0 : i32
    scf.if %2 {
      %cst_10 = arith.constant 0.000000e+00 : f32
      %12 = vector.broadcast %cst_10 : f32 to vector<16x96xf32>
      %c0_11 = arith.constant 0 : index
      %c0_12 = arith.constant 0 : index
      %13 = vector.load %arg7[%c0_11, %c0_12] : memref<16x96xf32, #tpu.memory_space<vmem>>, vector<16x96xf32>
      tpu.vector_store %arg7[%c0_11, %c0_12], %12 {strides = array<i32>} : memref<16x96xf32, #tpu.memory_space<vmem>>, vector<16x96xf32>,
    } else {
    }
    %c0 = arith.constant 0 : index
    %c0_1 = arith.constant 0 : index
    %3 = vector.load %arg7[%c0, %c0_1] : memref<16x96xf32, #tpu.memory_space<vmem>>, vector<16x96xf32>
    %c0_2 = arith.constant 0 : index
    %c0_3 = arith.constant 0 : index
    %4 = vector.load %arg3[%c0_2, %c0_3] : memref<16x32xbf16, #tpu.memory_space<vmem>>, vector<16x32xbf16>
    %c0_4 = arith.constant 0 : index
    %c0_5 = arith.constant 0 : index
    %5 = vector.load %arg4[%c0_4, %c0_5] : memref<96x32xbf16, #tpu.memory_space<vmem>>, vector<96x32xbf16>
    %cst = arith.constant dense<0.000000e+00> : vector<16x96xf32>
    %6 = tpu.matmul %4, %5, %cst {dimension_numbers = #tpu.dot_dimension_numbers<[1], [1], [0], [0], [0, 0, 1, 0], [], []>} : vector<16x32xbf16>, vector<96x32xbf16>, vector<16x96xf32> -> vector<16x96xf32>
    %7 = arith.addf %3, %6 : vector<16x96xf32>
    %c0_6 = arith.constant 0 : index
    %c0_7 = arith.constant 0 : index
    %8 = vector.load %arg7[%c0_6, %c0_7] : memref<16x96xf32, #tpu.memory_space<vmem>>, vector<16x96xf32>
    tpu.vector_store %arg7[%c0_6, %c0_7], %7 {strides = array<i32>} : memref<16x96xf32, #tpu.memory_space<vmem>>, vector<16x96xf32>,
    %c0_i32_8 = arith.constant 0 : i32
    %9 = arith.cmpi eq, %arg2, %c0_i32_8 : i32
    %10 = arith.extui %9 : i1 to i32
    %c0_i32_9 = arith.constant 0 : i32
    %11 = arith.cmpi ne, %10, %c0_i32_9 : i32
    scf.if %11 {
      %c0_10 = arith.constant 0 : index
      %c0_11 = arith.constant 0 : index
      %12 = vector.load %arg7[%c0_10, %c0_11] : memref<16x96xf32, #tpu.memory_space<vmem>>, vector<16x96xf32>
      %c0_12 = arith.constant 0 : index
      %c0_13 = arith.constant 0 : index
      %13 = vector.load %arg5[%c0_12, %c0_13] : memref<1x96xf32, #tpu.memory_space<vmem>>, vector<1x96xf32>
      %14 = vector.broadcast %13 : vector<1x96xf32> to vector<16x96xf32>
      %15 = arith.addf %12, %14 : vector<16x96xf32>
      %16 = arith.truncf %15 : vector<16x96xf32> to vector<16x96xbf16>
      %c0_14 = arith.constant 0 : index
      %c0_15 = arith.constant 0 : index
      %17 = vector.load %arg6[%c0_14, %c0_15] : memref<16x96xbf16, #tpu.memory_space<vmem>>, vector<16x96xbf16>
      tpu.vector_store %arg6[%c0_14, %c0_15], %16 {strides = array<i32>} : memref<16x96xbf16, #tpu.memory_space<vmem>>, vector<16x96xbf16>,
    } else {
    }
    return
  }
  func.func @transform_0(%arg0: i32, %arg1: i32, %arg2: i32) -> (i32, i32) {
    %c0_i32 = arith.constant 0 : i32
    return %arg0, %arg2 : i32, i32
  }
  func.func @transform_1(%arg0: i32, %arg1: i32, %arg2: i32) -> (i32, i32) {
    %c0_i32 = arith.constant 0 : i32
    return %arg1, %arg2 : i32, i32
  }
  func.func @transform_2(%arg0: i32, %arg1: i32, %arg2: i32) -> (i32, i32) {
    %c0_i32 = arith.constant 0 : i32
    %c0_i32_0 = arith.constant 0 : i32
    return %c0_i32, %arg1 : i32, i32
  }
  func.func @transform_3(%arg0: i32, %arg1: i32, %arg2: i32) -> (i32, i32) {
    %c0_i32 = arith.constant 0 : i32
    return %arg0, %arg1 : i32, i32
  }
}

</mosaic_0001>

<llo_original>
// kernel: tpu_custom_call.1
$region0: #{tpu_custom_call.1}
  #allocation0 [shape = 'u32[]', space=smem, size = 0x4, offset = 0x4, fixed_abs, tag = 'smem constant byte address 0x4 - core index']
  #allocation1 [shape = 'u32[144,128]{1,0:T(1,128)}', space=vmem, size = 0x12000, scoped, tag = 'internal scratch']
  #allocation2 [shape = 'f32[16,96]{1,0:T(8,128)}', space=vmem, size = 0x2000, scoped, tag = 'scratch operand']
  %s0 = inlined_call_operand.vmem [shape: bf16[16,32], index: 0, kind: input, shape index: {}]
  %s1 = inlined_call_operand.vmem [shape: bf16[96,32], index: 1, kind: input, shape index: {}]
  %s2 = inlined_call_operand.vmem [shape: f32[1,96], index: 2, kind: input, shape index: {}]
  %s3 = inlined_call_operand.hbm [shape: bf16[16,96], index: 3, kind: output, shape index: {}]
  %s4 = sld [smem:[#allocation0]]
  $region30: #{tpu_custom_call.1} parent=0
    _
  %s6 = ssub.s32 1, %s4
  %s7 = scalar_select 0, %s6, %s4
  $region1: #{tpu_custom_call.1} parent=0
    #allocation3 [shape = 'u8[4096]{0}', space=vmem, size = 0x1000, scoped, tag = 'output window, operand 0, single buffered']
    #allocation4 [shape = 's32[1]{0}', space=sflag, size = 0x4, scoped, tag = 'scoped memory for tpu_custom_call.1']
    %8 = vsyncpa [#allocation4], 0
    // Predicated region
    $region2: #{tpu_custom_call.1} parent=1 // pred_check
      _
    $region3: #{tpu_custom_call.1} parent=1 // pred_check_branch
      %10 = sbr.rel (0) target = $region5
    $region4: #{tpu_custom_call.1} parent=1 // pred_region
      _
    $region5: #{tpu_custom_call.1} parent=1 // pred_fallthru
      _
    // Predicated region
    $region6: #{tpu_custom_call.1} parent=1 // pred_check
      _
    $region7: #{tpu_custom_call.1} parent=1 // pred_check_branch
      %12 = sbr.rel (0) target = $region9
    $region8: #{tpu_custom_call.1} parent=1 // pred_region
      _
    $region9: #{tpu_custom_call.1} parent=1 // pred_fallthru
      _
    // Predicated region
    $region10: #{tpu_custom_call.1} parent=1 // pred_check
      _
    $region11: #{tpu_custom_call.1} parent=1 // pred_check_branch
      %14 = sbr.rel (0) target = $region13
    $region12: #{tpu_custom_call.1} parent=1 // pred_region
      _
    $region13: #{tpu_custom_call.1} parent=1 // pred_fallthru
      _
    %p16 = scmp.eq.s32.totalorder 0, 0
    // Predicated region
    $region14: #{tpu_custom_call.1} parent=1 // pred_check
      %p17 = pneg %p16
    $region15: #{tpu_custom_call.1} parent=1 // pred_check_branch
      %19 = sbr.rel (%p17) target = $region17
    $region16: #{tpu_custom_call.1} parent=1 // pred_region
      %vm20 = vcmask 785408
      %21 = vst.msk [vmem:[#allocation2] sm:$0xff] %vm20, 0.0
      %22 = vst.msk [vmem:[#allocation2 + $0x8] sm:$0xff] %vm20, 0.0
    $region17: #{tpu_custom_call.1} parent=1 // pred_fallthru
      _
    %v23 = vld [vmem:[#allocation2] sm:$0xff]
    %v24 = vld [vmem:[#allocation2 + $0x8] sm:$0xff]
    %v25 = vld [vmem:[%s0] sm:$0xf]
    %v26 = vld [vmem:[%s0 + $0x4] sm:$0xf]
    %v27 = vld [vmem:[%s1] sm:$0xf]
    %v28 = vld [vmem:[%s1 + $0x4] sm:$0xf]
    %v29 = vld [vmem:[%s1 + $0x8] sm:$0xf]
    %v30 = vld [vmem:[%s1 + $0xc] sm:$0xf]
    %v31 = vld [vmem:[%s1 + $0x10] sm:$0xf]
    %v32 = vld [vmem:[%s1 + $0x14] sm:$0xf]
    %v33 = vld [vmem:[%s1 + $0x18] sm:$0xf]
    %v34 = vld [vmem:[%s1 + $0x1c] sm:$0xf]
    %v35 = vld [vmem:[%s1 + $0x20] sm:$0xf]
    %v36 = vld [vmem:[%s1 + $0x24] sm:$0xf]
    %v37 = vld [vmem:[%s1 + $0x28] sm:$0xf]
    %v38 = vld [vmem:[%s1 + $0x2c] sm:$0xf]
    %v41 = vunpack.c.l.b16 %v25
    %v42 = vunpack.c.l.b16 %v26
    %v43 = vpack.c.b16 %v42, %v41
    %v56 = vunpack.c.l.b16 %v27
    %v57 = vunpack.c.l.b16 %v28
    %v58 = vunpack.c.l.b16 %v29
    %v59 = vunpack.c.l.b16 %v30
    %v60 = vunpack.c.l.b16 %v31
    %v61 = vunpack.c.l.b16 %v32
    %v62 = vunpack.c.l.b16 %v33
    %v63 = vunpack.c.l.b16 %v34
    %v64 = vunpack.c.l.b16 %v35
    %v65 = vunpack.c.l.b16 %v36
    %v66 = vunpack.c.l.b16 %v37
    %v67 = vunpack.c.l.b16 %v38
    %v68 = vpack.c.b16 %v57, %v56
    %v69 = vpack.c.b16 %v59, %v58
    %v70 = vpack.c.b16 %v61, %v60
    %v71 = vpack.c.b16 %v63, %v62
    %v72 = vpack.c.b16 %v65, %v64
    %v73 = vpack.c.b16 %v67, %v66
    %vm74 = vcmask 261120
    %v76 = vsel %vm74, %v43, 0
    %v79 = vsel %vm74, %v68, 0
    %v82 = vsel %vm74, %v69, 0
    %v85 = vsel %vm74, %v70, 0
    %v88 = vsel %vm74, %v71, 0
    %v91 = vsel %vm74, %v72, 0
    %v94 = vsel %vm74, %v73, 0
    %96 = vmatprep.subr.bf16.mxu0 0
    %97 = vmatpush1.bf16.xpose.msra.mxu0 %v79
    %98 = vmatprep.subr.bf16.mxu0 0
    %99 = vmatpush1.bf16.xpose.msra.mxu0 %v82
    %100 = vmatprep.subr.bf16.mxu0 0
    %101 = vmatpush1.bf16.xpose.msra.mxu0 %v85
    %102 = vmatprep.subr.bf16.mxu0 0
    %103 = vmatpush1.bf16.xpose.msra.mxu0 %v88
    %104 = vmatprep.subr.bf16.mxu0 0
    %105 = vmatpush1.bf16.xpose.msra.mxu0 %v91
    %106 = vmatprep.subr.bf16.mxu0 0
    %107 = vmatpush1.bf16.xpose.msra.mxu0 %v94
    %108 = vmatprep.subr.bf16.mxu0 0
    %109 = vmatpush1.bf16.xpose.msra.mxu0 0
    %110 = vmatprep.subr.bf16.mxu0 0
    %111 = vmatpush1.bf16.xpose.msra.mxu0 0
    %112 = vmatprep.subr.bf16.mxu0 0
    %113 = vmatpush1.bf16.xpose.msra.mxu0 0
    %114 = vmatprep.subr.bf16.mxu0 0
    %115 = vmatpush1.bf16.xpose.msra.mxu0 0
    %116 = vmatprep.subr.bf16.mxu0 0
    %117 = vmatpush1.bf16.xpose.msra.mxu0 0
    %118 = vmatprep.subr.bf16.mxu0 0
    %119 = vmatpush1.bf16.xpose.msra.mxu0 0
    %120 = vmatprep.subr.bf16.mxu0 0
    %121 = vmatpush1.bf16.xpose.msra.mxu0 0
    %122 = vmatprep.subr.bf16.mxu0 0
    %123 = vmatpush1.bf16.xpose.msra.mxu0 0
    %124 = vmatprep.subr.bf16.mxu0 0
    %125 = vmatpush1.bf16.xpose.msra.mxu0 0
    %126 = vmatprep.subr.bf16.mxu0 0
    %127 = vmatpush1.bf16.xpose.msra.mxu0 0
    %128 = vmatprep.mubr.bf16.mxu0 0
    %129 = vmatmul.mubr.bf16.gmra.mrb[0].mxu0 %v76
    %v130 = vpop.f32.mrb[0].mxu0
    %v131 = vadd.f32 0.0, %v130
    %v132 = vpop.f32.mrb[0].mxu0
    %v133 = vpop.f32.mrb[0].mxu0
    %v134 = vadd.f32 0.0, %v133
    %v135 = vpop.f32.mrb[0].mxu0
    %136 = vdwg.mxu0
    %v137 = vadd.f32 %v23, %v131
    %v138 = vadd.f32 %v24, %v134
    %vm139 = vcmask 785408
    %140 = vst.msk [vmem:[#allocation2] sm:$0xff] %vm139, %v137
    %141 = vst.msk [vmem:[#allocation2 + $0x8] sm:$0xff] %vm139, %v138
    // Predicated region
    $region18: #{tpu_custom_call.1} parent=1 // pred_check
      %p142 = pneg %p16
    $region19: #{tpu_custom_call.1} parent=1 // pred_check_branch
      %144 = sbr.rel (%p142) target = $region21
    $region20: #{tpu_custom_call.1} parent=1 // pred_region
      %v145 = vld [vmem:[#allocation2] sm:$0xff]
      %v146 = vld [vmem:[#allocation2 + $0x8] sm:$0xff]
      %v147 = vld [vmem:[%s2] sm:$0x1]
      %v149 = vlaneseq
      %v150 = vshrl.u32 %v149, 7
      %v151 = vsub.s32 0, %v150
      %v152 = vrot.slane %v147, %v151
      %v154 = vadd.f32 %v145, %v152
      %v155 = vadd.f32 %v146, %v152
      %v156 = vpack.c.bf16 %v155, %v154
      %v158 = vunpack.c.l.b16 %v156
      %v159 = vunpack.c.h.b16 %v156
      %v160 = vpack.c.b16 %v158, %v158
      %v161 = vpack.c.b16 %v159, %v159
      %vm164 = vcmask 781312
      %165 = vst.msk [vmem:[#allocation3] sm:$0xf] %vm164, %v160
      %166 = vst.msk [vmem:[#allocation3 + $0x4] sm:$0xf] %vm164, %v161
    $region21: #{tpu_custom_call.1} parent=1 // pred_fallthru
      _
    // Predicated region
    $region22: #{tpu_custom_call.1} parent=1 // pred_check
      _
    $region23: #{tpu_custom_call.1} parent=1 // pred_check_branch
      %168 = sbr.rel (0) target = $region25
    $region24: #{tpu_custom_call.1} parent=1 // pred_region
      %s170 = ssub.s32 128, 128
      %171 = vsyncadd [#allocation4], %s170
      %s172 = sshll.u32 [#allocation3], 4
      %s173 = int_to_ptr.vmem [resolvable:$true] %s172
      %178 = dma.vmem_to_hbm [thread:$0]  %s173, 128, %s3, [#allocation4], 64, 64, 4
    $region25: #{tpu_custom_call.1} parent=1 // pred_fallthru
      _
    // Predicated region
    $region26: #{tpu_custom_call.1} parent=1 // pred_check
      _
    $region27: #{tpu_custom_call.1} parent=1 // pred_check_branch
      %180 = sbr.rel (0) target = $region29
    $region28: #{tpu_custom_call.1} parent=1 // pred_region
      %181 = dma.done [#allocation4], 128
    $region29: #{tpu_custom_call.1} parent=1 // pred_fallthru
      _
    %182 = vsyncpa [#allocation4], 1

</llo_original>
